<compile_context>
chip_gen: v7x
topology: tpu7x:2x2x1
jax: 0.10.0
libtpu: 0.0.40
codegen_flags: <defaults>
</compile_context>

<pallas_src>
import jax
import jax.numpy as jnp
from jax.experimental import pallas as pl
from jax.experimental.pallas import tpu as pltpu


def _conv_padding_mode(mode: str) -> str:
    """Match the PyTorch helper: legacy names -> internal names."""
    if mode == "border":
        return "replicate"
    if mode == "reflection":
        return "reflect"
    return mode


def _fold_sources(p_lo, p_hi, n, mode):
    """For one axis: map interior target index -> list of padded-axis source indices.

    Padded axis has size p_lo + n + p_hi; low pads are 0..p_lo-1, high pads are
    p_lo+n .. p_lo+n+p_hi-1.  Targets follow np.pad / F.pad read semantics.
    """
    m = {}
    for k in range(p_lo):
        if mode == "symmetric":
            t = p_lo - 1 - k
        elif mode == "reflect":
            t = p_lo - k
        else:  # replicate
            t = 0
        assert 0 <= t < n, f"padding too large for interior (mode={mode}, n={n})"
        m.setdefault(t, []).append(k)
    for k in range(p_hi):
        if mode == "symmetric":
            t = n - 1 - k
        elif mode == "reflect":
            t = n - 2 - k
        else:  # replicate
            t = n - 1
        assert 0 <= t < n, f"padding too large for interior (mode={mode}, n={n})"
        m.setdefault(t, []).append(p_lo + n + k)
    return m


def _make_pad2dT_kernel(padding, mode, H, W):
    """Build a Pallas kernel for one (tn, tc, Hp, Wp) block -> (tn, tc, H, W)."""
    p_l, p_r, p_t, p_b = padding
    col_map = _fold_sources(p_l, p_r, W, mode)  # target col -> padded col sources
    row_map = _fold_sources(p_t, p_b, H, mode)  # target row -> padded row sources

    def kernel(x_ref, o_ref):
        # 1) Interior copy straight to the output block.
        o_ref[...] = x_ref[:, :, p_t:p_t + H, p_l:p_l + W]

        # 2) Pad columns x interior rows: narrow (H, 1) lane read-modify-writes.
        #    Sources sharing a target (replicate) are summed first -> one RMW.
        for ct, srcs in col_map.items():
            acc = x_ref[:, :, p_t:p_t + H, srcs[0]:srcs[0] + 1]
            for s in srcs[1:]:
                acc = acc + x_ref[:, :, p_t:p_t + H, s:s + 1]
            o_ref[:, :, :, ct:ct + 1] = o_ref[:, :, :, ct:ct + 1] + acc

        # 3) Pad rows (including corners): build a (.., 1, W) folded strip per
        #    target row, then one row RMW.  Corner values are scattered into the
        #    strip with a 1-row where (cheap), not full-tile masks.
        if row_map:
            lane = None
            if col_map:
                lane = jax.lax.broadcasted_iota(jnp.int32, (1, 1, 1, W), 3)
            for rt, row_srcs in row_map.items():
                strip = x_ref[:, :, row_srcs[0]:row_srcs[0] + 1, p_l:p_l + W]
                for a in row_srcs[1:]:
                    strip = strip + x_ref[:, :, a:a + 1, p_l:p_l + W]
                for ct, col_srcs in col_map.items():
                    corner = None
                    for a in row_srcs:
                        for b in col_srcs:
                            v = x_ref[:, :, a:a + 1, b:b + 1]
                            corner = v if corner is None else corner + v
                    strip = strip + jnp.where(lane == ct, corner,
                                              jnp.zeros_like(corner))
                o_ref[:, :, rt:rt + 1, :] = o_ref[:, :, rt:rt + 1, :] + strip

    return kernel


def _pick_tiles(N, C, Hp, Wp, H, W, itemsize):
    """Channel (and batch) tile sizes: keep double-buffered in+out blocks small
    enough for v7x's 64 MiB VMEM while amortizing per-grid-step overhead."""
    unit = (Hp * Wp + H * W) * itemsize * 2  # per-channel, double-buffered in+out
    budget = 28 * 1024 * 1024
    tc = int(max(1, min(C, budget // max(unit, 1))))
    if tc >= C:
        tc = C
        tn = int(max(1, min(N, budget // max(unit * C, 1))))
    else:
        tn = 1
    return tn, tc


def pad2dT(x, padding=(1, 1, 1, 1), mode="symmetric"):
    """Pallas implementation of pad2dT: x is the padded tensor (N, C, Hp, Wp)."""
    mode = _conv_padding_mode(mode)
    assert mode in ("symmetric", "reflect", "replicate"), mode
    p_l, p_r, p_t, p_b = padding
    N, C, Hp, Wp = x.shape
    H = Hp - p_t - p_b
    W = Wp - p_l - p_r
    assert H >= 1 and W >= 1, "padding too large for interior"

    kernel = _make_pad2dT_kernel(tuple(padding), mode, H, W)

    itemsize = jnp.dtype(x.dtype).itemsize
    tn, tc = _pick_tiles(N, C, Hp, Wp, H, W, itemsize)
    grid = (pl.cdiv(N, tn), pl.cdiv(C, tc))

    return pl.pallas_call(
        kernel,
        out_shape=jax.ShapeDtypeStruct((N, C, H, W), x.dtype),
        grid=grid,
        in_specs=[pl.BlockSpec((tn, tc, Hp, Wp), lambda n, c: (n, c, 0, 0))],
        out_specs=pl.BlockSpec((tn, tc, H, W), lambda n, c: (n, c, 0, 0)),
        compiler_params=pltpu.CompilerParams(
            dimension_semantics=("parallel", "parallel"),
            vmem_limit_bytes=48 * 1024 * 1024,
        ),
    )(x)


class Pad2dT:
    """Mirror of the PyTorch module (forward only)."""

    def __init__(self, padding=(1, 1, 1, 1), mode="symmetric"):
        self.padding = tuple(padding)
        self.mode = mode

    def __call__(self, x):
        return pad2dT(x, self.padding, self.mode)


def _adjoint_check(mode, jnp_mode, padding, key):
    """<Pad2d(x), y> must equal <x, Pad2dT(y)>."""
    N, C, H, W = 2, 4, 16, 16
    p_l, p_r, p_t, p_b = padding
    k1, k2 = jax.random.split(key)
    x_in = jax.random.normal(k1, (N, C, H, W), jnp.float32)
    y = jax.random.normal(k2, (N, C, H + p_t + p_b, W + p_l + p_r), jnp.float32)

    padded = jnp.pad(x_in, ((0, 0), (0, 0), (p_t, p_b), (p_l, p_r)), mode=jnp_mode)
    lhs = jnp.vdot(padded, y)

    out = jax.block_until_ready(Pad2dT(padding, mode)(y))
    rhs = jnp.vdot(x_in, out)

    assert abs(float(lhs) - float(rhs)) <= 1e-3 * max(1.0, abs(float(lhs))), (
        mode, float(lhs), float(rhs))
    return out


if __name__ == "__main__":
    key = jax.random.PRNGKey(0)

    # Main example: default module config Pad2dT(padding=[1,1,1,1], mode='symmetric')
    # Input is the *padded* tensor: (2, 4, 18, 18) -> output (2, 4, 16, 16).
    k_main, k_chk = jax.random.split(key)
    x = jax.random.normal(k_main, (2, 4, 18, 18), jnp.float32)
    out = jax.block_until_ready(Pad2dT([1, 1, 1, 1], "symmetric")(x))
    assert out.shape == (2, 4, 16, 16) and out.dtype == jnp.float32

    # Adjoint identity checks against jnp.pad for all supported modes
    # (including legacy name remapping 'border' -> 'replicate').
    keys = jax.random.split(k_chk, 4)
    _adjoint_check("symmetric", "symmetric", (1, 1, 1, 1), keys[0])
    _adjoint_check("reflect", "reflect", (1, 1, 1, 1), keys[1])
    _adjoint_check("border", "edge", (1, 1, 1, 1), keys[2])
    _adjoint_check("symmetric", "symmetric", (2, 1, 1, 2), keys[3])

    print("KERNEL_OK")
</pallas_src>

<mosaic_0001>
module attributes {stable_mosaic.version = 11 : i64} {
  func.func @kernel(%arg0: i32, %arg1: i32, %arg2: memref<2x4x18x18xf32, #tpu.memory_space<vmem>>, %arg3: memref<2x4x16x16xf32, #tpu.memory_space<vmem>>) attributes {dimension_semantics = [#tpu.dimension_semantics<parallel>, #tpu.dimension_semantics<parallel>], iteration_bounds = array<i64: 1, 1>, scalar_prefetch = 0 : i64, scratch_operands = 0 : i64, tpu.core_type = #tpu.core_type<tc>, window_params = [{transform_indices = @transform_0, window_bounds = array<i64: 2, 4, 18, 18>}, {transform_indices = @transform_1, window_bounds = array<i64: 2, 4, 16, 16>}]} {
    %c0 = arith.constant 0 : index
    %c0_0 = arith.constant 0 : index
    %c1 = arith.constant 1 : index
    %c1_1 = arith.constant 1 : index
    %0 = vector.load %arg2[%c0, %c0_0, %c1, %c1_1] : memref<2x4x18x18xf32, #tpu.memory_space<vmem>>, vector<2x4x16x16xf32>
    %c0_2 = arith.constant 0 : index
    %c0_3 = arith.constant 0 : index
    %c0_4 = arith.constant 0 : index
    %c0_5 = arith.constant 0 : index
    %1 = vector.load %arg3[%c0_2, %c0_3, %c0_4, %c0_5] : memref<2x4x16x16xf32, #tpu.memory_space<vmem>>, vector<2x4x16x16xf32>
    tpu.vector_store %arg3[%c0_2, %c0_3, %c0_4, %c0_5], %0 {strides = array<i32>} : memref<2x4x16x16xf32, #tpu.memory_space<vmem>>, vector<2x4x16x16xf32>,
    %c0_6 = arith.constant 0 : index
    %c0_7 = arith.constant 0 : index
    %c1_8 = arith.constant 1 : index
    %c0_9 = arith.constant 0 : index
    %2 = vector.load %arg2[%c0_6, %c0_7, %c1_8, %c0_9] : memref<2x4x18x18xf32, #tpu.memory_space<vmem>>, vector<2x4x16x1xf32>
    %c0_10 = arith.constant 0 : index
    %c0_11 = arith.constant 0 : index
    %c0_12 = arith.constant 0 : index
    %c0_13 = arith.constant 0 : index
    %3 = vector.load %arg3[%c0_10, %c0_11, %c0_12, %c0_13] : memref<2x4x16x16xf32, #tpu.memory_space<vmem>>, vector<2x4x16x1xf32>
    %4 = arith.addf %3, %2 : vector<2x4x16x1xf32>
    %c0_14 = arith.constant 0 : index
    %c0_15 = arith.constant 0 : index
    %c0_16 = arith.constant 0 : index
    %c0_17 = arith.constant 0 : index
    %5 = vector.load %arg3[%c0_14, %c0_15, %c0_16, %c0_17] : memref<2x4x16x16xf32, #tpu.memory_space<vmem>>, vector<2x4x16x1xf32>
    tpu.vector_store %arg3[%c0_14, %c0_15, %c0_16, %c0_17], %4 {strides = array<i32>} : memref<2x4x16x16xf32, #tpu.memory_space<vmem>>, vector<2x4x16x1xf32>,
    %c0_18 = arith.constant 0 : index
    %c0_19 = arith.constant 0 : index
    %c1_20 = arith.constant 1 : index
    %c17 = arith.constant 17 : index
    %6 = vector.load %arg2[%c0_18, %c0_19, %c1_20, %c17] : memref<2x4x18x18xf32, #tpu.memory_space<vmem>>, vector<2x4x16x1xf32>
    %c0_21 = arith.constant 0 : index
    %c0_22 = arith.constant 0 : index
    %c0_23 = arith.constant 0 : index
    %c15 = arith.constant 15 : index
    %7 = vector.load %arg3[%c0_21, %c0_22, %c0_23, %c15] : memref<2x4x16x16xf32, #tpu.memory_space<vmem>>, vector<2x4x16x1xf32>
    %8 = arith.addf %7, %6 : vector<2x4x16x1xf32>
    %c0_24 = arith.constant 0 : index
    %c0_25 = arith.constant 0 : index
    %c0_26 = arith.constant 0 : index
    %c15_27 = arith.constant 15 : index
    %9 = vector.load %arg3[%c0_24, %c0_25, %c0_26, %c15_27] : memref<2x4x16x16xf32, #tpu.memory_space<vmem>>, vector<2x4x16x1xf32>
    tpu.vector_store %arg3[%c0_24, %c0_25, %c0_26, %c15_27], %8 {strides = array<i32>} : memref<2x4x16x16xf32, #tpu.memory_space<vmem>>, vector<2x4x16x1xf32>,
    %10 = tpu.iota {dimensions = array<i32: 3>} : vector<1x1x1x16xi32>
    %c0_28 = arith.constant 0 : index
    %c0_29 = arith.constant 0 : index
    %c0_30 = arith.constant 0 : index
    %c1_31 = arith.constant 1 : index
    %11 = vector.load %arg2[%c0_28, %c0_29, %c0_30, %c1_31] : memref<2x4x18x18xf32, #tpu.memory_space<vmem>>, vector<2x4x1x16xf32>
    %c0_32 = arith.constant 0 : index
    %c0_33 = arith.constant 0 : index
    %c0_34 = arith.constant 0 : index
    %c0_35 = arith.constant 0 : index
    %12 = vector.load %arg2[%c0_32, %c0_33, %c0_34, %c0_35] : memref<2x4x18x18xf32, #tpu.memory_space<vmem>>, vector<2x4x1x1xf32>
    %c0_i32 = arith.constant 0 : i32
    %13 = vector.broadcast %c0_i32 : i32 to vector<1x1x1x16xi32>
    %14 = arith.cmpi eq, %10, %13 : vector<1x1x1x16xi32>
    %cst = arith.constant 0.000000e+00 : f32
    %15 = vector.broadcast %cst : f32 to vector<2x4x1x1xf32>
    %16 = vector.shape_cast %14 : vector<1x1x1x16xi1> to vector<1x1x1x16xi1>
    %17 = vector.broadcast %16 : vector<1x1x1x16xi1> to vector<2x4x1x16xi1>
    %18 = vector.shape_cast %12 : vector<2x4x1x1xf32> to vector<2x4x1x1xf32>
    %19 = vector.broadcast %18 : vector<2x4x1x1xf32> to vector<2x4x1x16xf32>
    %20 = vector.shape_cast %15 : vector<2x4x1x1xf32> to vector<2x4x1x1xf32>
    %21 = vector.broadcast %20 : vector<2x4x1x1xf32> to vector<2x4x1x16xf32>
    %22 = arith.select %17, %19, %21 : vector<2x4x1x16xi1>, vector<2x4x1x16xf32>
    %23 = arith.addf %11, %22 : vector<2x4x1x16xf32>
    %c0_36 = arith.constant 0 : index
    %c0_37 = arith.constant 0 : index
    %c0_38 = arith.constant 0 : index
    %c17_39 = arith.constant 17 : index
    %24 = vector.load %arg2[%c0_36, %c0_37, %c0_38, %c17_39] : memref<2x4x18x18xf32, #tpu.memory_space<vmem>>, vector<2x4x1x1xf32>
    %c15_i32 = arith.constant 15 : i32
    %25 = vector.broadcast %c15_i32 : i32 to vector<1x1x1x16xi32>
    %26 = arith.cmpi eq, %10, %25 : vector<1x1x1x16xi32>
    %cst_40 = arith.constant 0.000000e+00 : f32
    %27 = vector.broadcast %cst_40 : f32 to vector<2x4x1x1xf32>
    %28 = vector.shape_cast %26 : vector<1x1x1x16xi1> to vector<1x1x1x16xi1>
    %29 = vector.broadcast %28 : vector<1x1x1x16xi1> to vector<2x4x1x16xi1>
    %30 = vector.shape_cast %24 : vector<2x4x1x1xf32> to vector<2x4x1x1xf32>
    %31 = vector.broadcast %30 : vector<2x4x1x1xf32> to vector<2x4x1x16xf32>
    %32 = vector.shape_cast %27 : vector<2x4x1x1xf32> to vector<2x4x1x1xf32>
    %33 = vector.broadcast %32 : vector<2x4x1x1xf32> to vector<2x4x1x16xf32>
    %34 = arith.select %29, %31, %33 : vector<2x4x1x16xi1>, vector<2x4x1x16xf32>
    %35 = arith.addf %23, %34 : vector<2x4x1x16xf32>
    %c0_41 = arith.constant 0 : index
    %c0_42 = arith.constant 0 : index
    %c0_43 = arith.constant 0 : index
    %c0_44 = arith.constant 0 : index
    %36 = vector.load %arg3[%c0_41, %c0_42, %c0_43, %c0_44] : memref<2x4x16x16xf32, #tpu.memory_space<vmem>>, vector<2x4x1x16xf32>
    %37 = arith.addf %36, %35 : vector<2x4x1x16xf32>
    %c0_45 = arith.constant 0 : index
    %c0_46 = arith.constant 0 : index
    %c0_47 = arith.constant 0 : index
    %c0_48 = arith.constant 0 : index
    %38 = vector.load %arg3[%c0_45, %c0_46, %c0_47, %c0_48] : memref<2x4x16x16xf32, #tpu.memory_space<vmem>>, vector<2x4x1x16xf32>
    tpu.vector_store %arg3[%c0_45, %c0_46, %c0_47, %c0_48], %37 {strides = array<i32>} : memref<2x4x16x16xf32, #tpu.memory_space<vmem>>, vector<2x4x1x16xf32>,
    %c0_49 = arith.constant 0 : index
    %c0_50 = arith.constant 0 : index
    %c17_51 = arith.constant 17 : index
    %c1_52 = arith.constant 1 : index
    %39 = vector.load %arg2[%c0_49, %c0_50, %c17_51, %c1_52] : memref<2x4x18x18xf32, #tpu.memory_space<vmem>>, vector<2x4x1x16xf32>
    %c0_53 = arith.constant 0 : index
    %c0_54 = arith.constant 0 : index
    %c17_55 = arith.constant 17 : index
    %c0_56 = arith.constant 0 : index
    %40 = vector.load %arg2[%c0_53, %c0_54, %c17_55, %c0_56] : memref<2x4x18x18xf32, #tpu.memory_space<vmem>>, vector<2x4x1x1xf32>
    %c0_i32_57 = arith.constant 0 : i32
    %41 = vector.broadcast %c0_i32_57 : i32 to vector<1x1x1x16xi32>
    %42 = arith.cmpi eq, %10, %41 : vector<1x1x1x16xi32>
    %cst_58 = arith.constant 0.000000e+00 : f32
    %43 = vector.broadcast %cst_58 : f32 to vector<2x4x1x1xf32>
    %44 = vector.shape_cast %42 : vector<1x1x1x16xi1> to vector<1x1x1x16xi1>
    %45 = vector.broadcast %44 : vector<1x1x1x16xi1> to vector<2x4x1x16xi1>
    %46 = vector.shape_cast %40 : vector<2x4x1x1xf32> to vector<2x4x1x1xf32>
    %47 = vector.broadcast %46 : vector<2x4x1x1xf32> to vector<2x4x1x16xf32>
    %48 = vector.shape_cast %43 : vector<2x4x1x1xf32> to vector<2x4x1x1xf32>
    %49 = vector.broadcast %48 : vector<2x4x1x1xf32> to vector<2x4x1x16xf32>
    %50 = arith.select %45, %47, %49 : vector<2x4x1x16xi1>, vector<2x4x1x16xf32>
    %51 = arith.addf %39, %50 : vector<2x4x1x16xf32>
    %c0_59 = arith.constant 0 : index
    %c0_60 = arith.constant 0 : index
    %c17_61 = arith.constant 17 : index
    %c17_62 = arith.constant 17 : index
    %52 = vector.load %arg2[%c0_59, %c0_60, %c17_61, %c17_62] : memref<2x4x18x18xf32, #tpu.memory_space<vmem>>, vector<2x4x1x1xf32>
    %c15_i32_63 = arith.constant 15 : i32
    %53 = vector.broadcast %c15_i32_63 : i32 to vector<1x1x1x16xi32>
    %54 = arith.cmpi eq, %10, %53 : vector<1x1x1x16xi32>
    %cst_64 = arith.constant 0.000000e+00 : f32
    %55 = vector.broadcast %cst_64 : f32 to vector<2x4x1x1xf32>
    %56 = vector.shape_cast %54 : vector<1x1x1x16xi1> to vector<1x1x1x16xi1>
    %57 = vector.broadcast %56 : vector<1x1x1x16xi1> to vector<2x4x1x16xi1>
    %58 = vector.shape_cast %52 : vector<2x4x1x1xf32> to vector<2x4x1x1xf32>
    %59 = vector.broadcast %58 : vector<2x4x1x1xf32> to vector<2x4x1x16xf32>
    %60 = vector.shape_cast %55 : vector<2x4x1x1xf32> to vector<2x4x1x1xf32>
    %61 = vector.broadcast %60 : vector<2x4x1x1xf32> to vector<2x4x1x16xf32>
    %62 = arith.select %57, %59, %61 : vector<2x4x1x16xi1>, vector<2x4x1x16xf32>
    %63 = arith.addf %51, %62 : vector<2x4x1x16xf32>
    %c0_65 = arith.constant 0 : index
    %c0_66 = arith.constant 0 : index
    %c15_67 = arith.constant 15 : index
    %c0_68 = arith.constant 0 : index
    %64 = vector.load %arg3[%c0_65, %c0_66, %c15_67, %c0_68] : memref<2x4x16x16xf32, #tpu.memory_space<vmem>>, vector<2x4x1x16xf32>
    %65 = arith.addf %64, %63 : vector<2x4x1x16xf32>
    %c0_69 = arith.constant 0 : index
    %c0_70 = arith.constant 0 : index
    %c15_71 = arith.constant 15 : index
    %c0_72 = arith.constant 0 : index
    %66 = vector.load %arg3[%c0_69, %c0_70, %c15_71, %c0_72] : memref<2x4x16x16xf32, #tpu.memory_space<vmem>>, vector<2x4x1x16xf32>
    tpu.vector_store %arg3[%c0_69, %c0_70, %c15_71, %c0_72], %65 {strides = array<i32>} : memref<2x4x16x16xf32, #tpu.memory_space<vmem>>, vector<2x4x1x16xf32>,
    return
  }
  func.func @transform_0(%arg0: i32, %arg1: i32) -> (i32, i32, i32, i32) {
    %c0_i32 = arith.constant 0 : i32
    %c0_i32_0 = arith.constant 0 : i32
    %c0_i32_1 = arith.constant 0 : i32
    return %arg0, %arg1, %c0_i32, %c0_i32_0 : i32, i32, i32, i32
  }
  func.func @transform_1(%arg0: i32, %arg1: i32) -> (i32, i32, i32, i32) {
    %c0_i32 = arith.constant 0 : i32
    %c0_i32_0 = arith.constant 0 : i32
    %c0_i32_1 = arith.constant 0 : i32
    return %arg0, %arg1, %c0_i32, %c0_i32_0 : i32, i32, i32, i32
  }
}

</mosaic_0001>

<llo_original>
// kernel: tpu_custom_call.1
$region0: #{tpu_custom_call.1}
  #allocation0 [shape = 'u32[]', space=smem, size = 0x4, offset = 0x4, fixed_abs, tag = 'smem constant byte address 0x4 - core index']
  #allocation1 [shape = 'u32[144,128]{1,0:T(1,128)}', space=vmem, size = 0x12000, scoped, tag = 'internal scratch']
  %s0 = inlined_call_operand.vmem [shape: f32[2,4,18,18], index: 0, kind: input, shape index: {}]
  %s1 = inlined_call_operand.hbm [shape: f32[2,4,16,16], index: 1, kind: output, shape index: {}]
  %s2 = sld [smem:[#allocation0]]
  $region14: #{tpu_custom_call.1} parent=0
    _
  %s4 = ssub.s32 1, %s2
  %s5 = scalar_select 0, %s4, %s2
  $region1: #{tpu_custom_call.1} parent=0
    #allocation2 [shape = 'u8[65536]{0}', space=vmem, size = 0x10000, scoped, tag = 'output window, operand 0, single buffered']
    #allocation3 [shape = 's32[1]{0}', space=sflag, size = 0x4, scoped, tag = 'scoped memory for tpu_custom_call.1']
    %6 = vsyncpa [#allocation3], 0
    // Predicated region
    $region2: #{tpu_custom_call.1} parent=1 // pred_check
      _
    $region3: #{tpu_custom_call.1} parent=1 // pred_check_branch
      %8 = sbr.rel (0) target = $region5
    $region4: #{tpu_custom_call.1} parent=1 // pred_region
      _
    $region5: #{tpu_custom_call.1} parent=1 // pred_fallthru
      _
    %v9 = vld [vmem:[%s0 + $0x1] sm:$0xff]
    %v10 = vld [vmem:[%s0 + $0x9] sm:$0xff]
    %v11 = vld [vmem:[%s0 + $0x19] sm:$0xff]
    %v12 = vld [vmem:[%s0 + $0x21] sm:$0xff]
    %v13 = vld [vmem:[%s0 + $0x31] sm:$0xff]
    %v14 = vld [vmem:[%s0 + $0x39] sm:$0xff]
    %v15 = vld [vmem:[%s0 + $0x49] sm:$0xff]
    %v16 = vld [vmem:[%s0 + $0x51] sm:$0xff]
    %v17 = vld [vmem:[%s0 + $0x61] sm:$0xff]
    %v18 = vld [vmem:[%s0 + $0x69] sm:$0xff]
    %v19 = vld [vmem:[%s0 + $0x79] sm:$0xff]
    %v20 = vld [vmem:[%s0 + $0x81] sm:$0xff]
    %v21 = vld [vmem:[%s0 + $0x91] sm:$0xff]
    %v22 = vld [vmem:[%s0 + $0x99] sm:$0xff]
    %v23 = vld [vmem:[%s0 + $0xa9] sm:$0xff]
    %v24 = vld [vmem:[%s0 + $0xb1] sm:$0xff]
    %41 = vrot.lane.b32.xlu0 %v9, 127
    %v42 = vpop.permute.xlu0 %41
    %43 = vrot.lane.b32.xlu0 %v10, 127
    %v44 = vpop.permute.xlu0 %43
    %45 = vrot.lane.b32.xlu0 %v11, 127
    %v46 = vpop.permute.xlu0 %45
    %47 = vrot.lane.b32.xlu0 %v12, 127
    %v48 = vpop.permute.xlu0 %47
    %49 = vrot.lane.b32.xlu0 %v13, 127
    %v50 = vpop.permute.xlu0 %49
    %51 = vrot.lane.b32.xlu0 %v14, 127
    %v52 = vpop.permute.xlu0 %51
    %53 = vrot.lane.b32.xlu0 %v15, 127
    %v54 = vpop.permute.xlu0 %53
    %55 = vrot.lane.b32.xlu0 %v16, 127
    %v56 = vpop.permute.xlu0 %55
    %57 = vrot.lane.b32.xlu0 %v17, 127
    %v58 = vpop.permute.xlu0 %57
    %59 = vrot.lane.b32.xlu0 %v18, 127
    %v60 = vpop.permute.xlu0 %59
    %61 = vrot.lane.b32.xlu0 %v19, 127
    %v62 = vpop.permute.xlu0 %61
    %63 = vrot.lane.b32.xlu0 %v20, 127
    %v64 = vpop.permute.xlu0 %63
    %65 = vrot.lane.b32.xlu0 %v21, 127
    %v66 = vpop.permute.xlu0 %65
    %67 = vrot.lane.b32.xlu0 %v22, 127
    %v68 = vpop.permute.xlu0 %67
    %69 = vrot.lane.b32.xlu0 %v23, 127
    %v70 = vpop.permute.xlu0 %69
    %71 = vrot.lane.b32.xlu0 %v24, 127
    %v72 = vpop.permute.xlu0 %71
    %vm89 = vcmask 130048
    %90 = vst.msk [vmem:[#allocation2] sm:$0xff] %vm89, %v42
    %91 = vst.msk [vmem:[#allocation2 + $0x8] sm:$0xff] %vm89, %v44
    %92 = vst.msk [vmem:[#allocation2 + $0x10] sm:$0xff] %vm89, %v46
    %93 = vst.msk [vmem:[#allocation2 + $0x18] sm:$0xff] %vm89, %v48
    %94 = vst.msk [vmem:[#allocation2 + $0x20] sm:$0xff] %vm89, %v50
    %95 = vst.msk [vmem:[#allocation2 + $0x28] sm:$0xff] %vm89, %v52
    %96 = vst.msk [vmem:[#allocation2 + $0x30] sm:$0xff] %vm89, %v54
    %97 = vst.msk [vmem:[#allocation2 + $0x38] sm:$0xff] %vm89, %v56
    %98 = vst.msk [vmem:[#allocation2 + $0x40] sm:$0xff] %vm89, %v58
    %99 = vst.msk [vmem:[#allocation2 + $0x48] sm:$0xff] %vm89, %v60
    %100 = vst.msk [vmem:[#allocation2 + $0x50] sm:$0xff] %vm89, %v62
    %101 = vst.msk [vmem:[#allocation2 + $0x58] sm:$0xff] %vm89, %v64
    %102 = vst.msk [vmem:[#allocation2 + $0x60] sm:$0xff] %vm89, %v66
    %103 = vst.msk [vmem:[#allocation2 + $0x68] sm:$0xff] %vm89, %v68
    %104 = vst.msk [vmem:[#allocation2 + $0x70] sm:$0xff] %vm89, %v70
    %105 = vst.msk [vmem:[#allocation2 + $0x78] sm:$0xff] %vm89, %v72
    %v106 = vld [vmem:[%s0 + $0x1] sm:$0xff]
    %v107 = vld [vmem:[%s0 + $0x9] sm:$0xff]
    %v108 = vld [vmem:[%s0 + $0x19] sm:$0xff]
    %v109 = vld [vmem:[%s0 + $0x21] sm:$0xff]
    %v110 = vld [vmem:[%s0 + $0x31] sm:$0xff]
    %v111 = vld [vmem:[%s0 + $0x39] sm:$0xff]
    %v112 = vld [vmem:[%s0 + $0x49] sm:$0xff]
    %v113 = vld [vmem:[%s0 + $0x51] sm:$0xff]
    %v114 = vld [vmem:[%s0 + $0x61] sm:$0xff]
    %v115 = vld [vmem:[%s0 + $0x69] sm:$0xff]
    %v116 = vld [vmem:[%s0 + $0x79] sm:$0xff]
    %v117 = vld [vmem:[%s0 + $0x81] sm:$0xff]
    %v118 = vld [vmem:[%s0 + $0x91] sm:$0xff]
    %v119 = vld [vmem:[%s0 + $0x99] sm:$0xff]
    %v120 = vld [vmem:[%s0 + $0xa9] sm:$0xff]
    %v121 = vld [vmem:[%s0 + $0xb1] sm:$0xff]
    %v122 = vld [vmem:[#allocation2] sm:$0xff]
    %v123 = vld [vmem:[#allocation2 + $0x8] sm:$0xff]
    %v124 = vld [vmem:[#allocation2 + $0x10] sm:$0xff]
    %v125 = vld [vmem:[#allocation2 + $0x18] sm:$0xff]
    %v126 = vld [vmem:[#allocation2 + $0x20] sm:$0xff]
    %v127 = vld [vmem:[#allocation2 + $0x28] sm:$0xff]
    %v128 = vld [vmem:[#allocation2 + $0x30] sm:$0xff]
    %v129 = vld [vmem:[#allocation2 + $0x38] sm:$0xff]
    %v130 = vld [vmem:[#allocation2 + $0x40] sm:$0xff]
    %v131 = vld [vmem:[#allocation2 + $0x48] sm:$0xff]
    %v132 = vld [vmem:[#allocation2 + $0x50] sm:$0xff]
    %v133 = vld [vmem:[#allocation2 + $0x58] sm:$0xff]
    %v134 = vld [vmem:[#allocation2 + $0x60] sm:$0xff]
    %v135 = vld [vmem:[#allocation2 + $0x68] sm:$0xff]
    %v136 = vld [vmem:[#allocation2 + $0x70] sm:$0xff]
    %v137 = vld [vmem:[#allocation2 + $0x78] sm:$0xff]
    %v138 = vadd.f32 %v122, %v106
    %v139 = vadd.f32 %v123, %v107
    %v140 = vadd.f32 %v124, %v108
    %v141 = vadd.f32 %v125, %v109
    %v142 = vadd.f32 %v126, %v110
    %v143 = vadd.f32 %v127, %v111
    %v144 = vadd.f32 %v128, %v112
    %v145 = vadd.f32 %v129, %v113
    %v146 = vadd.f32 %v130, %v114
    %v147 = vadd.f32 %v131, %v115
    %v148 = vadd.f32 %v132, %v116
    %v149 = vadd.f32 %v133, %v117
    %v150 = vadd.f32 %v134, %v118
    %v151 = vadd.f32 %v135, %v119
    %v152 = vadd.f32 %v136, %v120
    %v153 = vadd.f32 %v137, %v121
    %vm154 = vcmask 7168
    %155 = vst.msk [vmem:[#allocation2] sm:$0xff] %vm154, %v138
    %156 = vst.msk [vmem:[#allocation2 + $0x8] sm:$0xff] %vm154, %v139
    %157 = vst.msk [vmem:[#allocation2 + $0x10] sm:$0xff] %vm154, %v140
    %158 = vst.msk [vmem:[#allocation2 + $0x18] sm:$0xff] %vm154, %v141
    %159 = vst.msk [vmem:[#allocation2 + $0x20] sm:$0xff] %vm154, %v142
    %160 = vst.msk [vmem:[#allocation2 + $0x28] sm:$0xff] %vm154, %v143
    %161 = vst.msk [vmem:[#allocation2 + $0x30] sm:$0xff] %vm154, %v144
    %162 = vst.msk [vmem:[#allocation2 + $0x38] sm:$0xff] %vm154, %v145
    %163 = vst.msk [vmem:[#allocation2 + $0x40] sm:$0xff] %vm154, %v146
    %164 = vst.msk [vmem:[#allocation2 + $0x48] sm:$0xff] %vm154, %v147
    %165 = vst.msk [vmem:[#allocation2 + $0x50] sm:$0xff] %vm154, %v148
    %166 = vst.msk [vmem:[#allocation2 + $0x58] sm:$0xff] %vm154, %v149
    %167 = vst.msk [vmem:[#allocation2 + $0x60] sm:$0xff] %vm154, %v150
    %168 = vst.msk [vmem:[#allocation2 + $0x68] sm:$0xff] %vm154, %v151
    %169 = vst.msk [vmem:[#allocation2 + $0x70] sm:$0xff] %vm154, %v152
    %170 = vst.msk [vmem:[#allocation2 + $0x78] sm:$0xff] %vm154, %v153
    %v171 = vld [vmem:[%s0 + $0x1] sm:$0xff]
    %v172 = vld [vmem:[%s0 + $0x9] sm:$0xff]
    %v173 = vld [vmem:[%s0 + $0x19] sm:$0xff]
    %v174 = vld [vmem:[%s0 + $0x21] sm:$0xff]
    %v175 = vld [vmem:[%s0 + $0x31] sm:$0xff]
    %v176 = vld [vmem:[%s0 + $0x39] sm:$0xff]
    %v177 = vld [vmem:[%s0 + $0x49] sm:$0xff]
    %v178 = vld [vmem:[%s0 + $0x51] sm:$0xff]
    %v179 = vld [vmem:[%s0 + $0x61] sm:$0xff]
    %v180 = vld [vmem:[%s0 + $0x69] sm:$0xff]
    %v181 = vld [vmem:[%s0 + $0x79] sm:$0xff]
    %v182 = vld [vmem:[%s0 + $0x81] sm:$0xff]
    %v183 = vld [vmem:[%s0 + $0x91] sm:$0xff]
    %v184 = vld [vmem:[%s0 + $0x99] sm:$0xff]
    %v185 = vld [vmem:[%s0 + $0xa9] sm:$0xff]
    %v186 = vld [vmem:[%s0 + $0xb1] sm:$0xff]
    %v187 = vld [vmem:[#allocation2] sm:$0xff]
    %v188 = vld [vmem:[#allocation2 + $0x8] sm:$0xff]
    %v189 = vld [vmem:[#allocation2 + $0x10] sm:$0xff]
    %v190 = vld [vmem:[#allocation2 + $0x18] sm:$0xff]
    %v191 = vld [vmem:[#allocation2 + $0x20] sm:$0xff]
    %v192 = vld [vmem:[#allocation2 + $0x28] sm:$0xff]
    %v193 = vld [vmem:[#allocation2 + $0x30] sm:$0xff]
    %v194 = vld [vmem:[#allocation2 + $0x38] sm:$0xff]
    %v195 = vld [vmem:[#allocation2 + $0x40] sm:$0xff]
    %v196 = vld [vmem:[#allocation2 + $0x48] sm:$0xff]
    %v197 = vld [vmem:[#allocation2 + $0x50] sm:$0xff]
    %v198 = vld [vmem:[#allocation2 + $0x58] sm:$0xff]
    %v199 = vld [vmem:[#allocation2 + $0x60] sm:$0xff]
    %v200 = vld [vmem:[#allocation2 + $0x68] sm:$0xff]
    %v201 = vld [vmem:[#allocation2 + $0x70] sm:$0xff]
    %v202 = vld [vmem:[#allocation2 + $0x78] sm:$0xff]
    %219 = vrot.lane.b32.xlu0 %v171, 126
    %v220 = vpop.permute.xlu0 %219
    %221 = vrot.lane.b32.xlu0 %v172, 126
    %v222 = vpop.permute.xlu0 %221
    %223 = vrot.lane.b32.xlu0 %v173, 126
    %v224 = vpop.permute.xlu0 %223
    %225 = vrot.lane.b32.xlu0 %v174, 126
    %v226 = vpop.permute.xlu0 %225
    %227 = vrot.lane.b32.xlu0 %v175, 126
    %v228 = vpop.permute.xlu0 %227
    %229 = vrot.lane.b32.xlu0 %v176, 126
    %v230 = vpop.permute.xlu0 %229
    %231 = vrot.lane.b32.xlu0 %v177, 126
    %v232 = vpop.permute.xlu0 %231
    %233 = vrot.lane.b32.xlu0 %v178, 126
    %v234 = vpop.permute.xlu0 %233
    %235 = vrot.lane.b32.xlu0 %v179, 126
    %v236 = vpop.permute.xlu0 %235
    %237 = vrot.lane.b32.xlu0 %v180, 126
    %v238 = vpop.permute.xlu0 %237
    %239 = vrot.lane.b32.xlu0 %v181, 126
    %v240 = vpop.permute.xlu0 %239
    %241 = vrot.lane.b32.xlu0 %v182, 126
    %v242 = vpop.permute.xlu0 %241
    %243 = vrot.lane.b32.xlu0 %v183, 126
    %v244 = vpop.permute.xlu0 %243
    %245 = vrot.lane.b32.xlu0 %v184, 126
    %v246 = vpop.permute.xlu0 %245
    %247 = vrot.lane.b32.xlu0 %v185, 126
    %v248 = vpop.permute.xlu0 %247
    %249 = vrot.lane.b32.xlu0 %v186, 126
    %v250 = vpop.permute.xlu0 %249
    %v267 = vadd.f32 %v187, %v220
    %v268 = vadd.f32 %v188, %v222
    %v269 = vadd.f32 %v189, %v224
    %v270 = vadd.f32 %v190, %v226
    %v271 = vadd.f32 %v191, %v228
    %v272 = vadd.f32 %v192, %v230
    %v273 = vadd.f32 %v193, %v232
    %v274 = vadd.f32 %v194, %v234
    %v275 = vadd.f32 %v195, %v236
    %v276 = vadd.f32 %v196, %v238
    %v277 = vadd.f32 %v197, %v240
    %v278 = vadd.f32 %v198, %v242
    %v279 = vadd.f32 %v199, %v244
    %v280 = vadd.f32 %v200, %v246
    %v281 = vadd.f32 %v201, %v248
    %v282 = vadd.f32 %v202, %v250
    %vm283 = vcmask 130168
    %284 = vst.msk [vmem:[#allocation2] sm:$0xff] %vm283, %v267
    %285 = vst.msk [vmem:[#allocation2 + $0x8] sm:$0xff] %vm283, %v268
    %286 = vst.msk [vmem:[#allocation2 + $0x10] sm:$0xff] %vm283, %v269
    %287 = vst.msk [vmem:[#allocation2 + $0x18] sm:$0xff] %vm283, %v270
    %288 = vst.msk [vmem:[#allocation2 + $0x20] sm:$0xff] %vm283, %v271
    %289 = vst.msk [vmem:[#allocation2 + $0x28] sm:$0xff] %vm283, %v272
    %290 = vst.msk [vmem:[#allocation2 + $0x30] sm:$0xff] %vm283, %v273
    %291 = vst.msk [vmem:[#allocation2 + $0x38] sm:$0xff] %vm283, %v274
    %292 = vst.msk [vmem:[#allocation2 + $0x40] sm:$0xff] %vm283, %v275
    %293 = vst.msk [vmem:[#allocation2 + $0x48] sm:$0xff] %vm283, %v276
    %294 = vst.msk [vmem:[#allocation2 + $0x50] sm:$0xff] %vm283, %v277
    %295 = vst.msk [vmem:[#allocation2 + $0x58] sm:$0xff] %vm283, %v278
    %296 = vst.msk [vmem:[#allocation2 + $0x60] sm:$0xff] %vm283, %v279
    %297 = vst.msk [vmem:[#allocation2 + $0x68] sm:$0xff] %vm283, %v280
    %298 = vst.msk [vmem:[#allocation2 + $0x70] sm:$0xff] %vm283, %v281
    %299 = vst.msk [vmem:[#allocation2 + $0x78] sm:$0xff] %vm283, %v282
    %v300 = vlaneseq
    %v301 = vand.u32 %v300, 127
    %v302 = vld [vmem:[%s0] sm:$0x1]
    %v303 = vld [vmem:[%s0 + $0x18] sm:$0x1]
    %v304 = vld [vmem:[%s0 + $0x30] sm:$0x1]
    %v305 = vld [vmem:[%s0 + $0x48] sm:$0x1]
    %v306 = vld [vmem:[%s0 + $0x60] sm:$0x1]
    %v307 = vld [vmem:[%s0 + $0x78] sm:$0x1]
    %v308 = vld [vmem:[%s0 + $0x90] sm:$0x1]
    %v309 = vld [vmem:[%s0 + $0xa8] sm:$0x1]
    %vm310 = vcmp.eq.s32.totalorder %v301, 0
    %v311 = vsel %vm310, 1, 0
    %vm312 = vcmp.eq.s32.totalorder %v311, 1
    %314 = vset.pattern.permute.xlu0 0
    %315 = vperm.xlu0 %314, %v302
    %v316 = vpop.permute.xlu0 %315
    %319 = vset.pattern.permute.xlu0 0
    %320 = vperm.xlu0 %319, %v303
    %v321 = vpop.permute.xlu0 %320
    %324 = vset.pattern.permute.xlu0 0
    %325 = vperm.xlu0 %324, %v304
    %v326 = vpop.permute.xlu0 %325
    %329 = vset.pattern.permute.xlu0 0
    %330 = vperm.xlu0 %329, %v305
    %v331 = vpop.permute.xlu0 %330
    %334 = vset.pattern.permute.xlu0 0
    %335 = vperm.xlu0 %334, %v306
    %v336 = vpop.permute.xlu0 %335
    %339 = vset.pattern.permute.xlu0 0
    %340 = vperm.xlu0 %339, %v307
    %v341 = vpop.permute.xlu0 %340
    %344 = vset.pattern.permute.xlu0 0
    %345 = vperm.xlu0 %344, %v308
    %v346 = vpop.permute.xlu0 %345
    %349 = vset.pattern.permute.xlu0 0
    %350 = vperm.xlu0 %349, %v309
    %v351 = vpop.permute.xlu0 %350
    %v353 = vsel %vm312, %v316, 0.0
    %v354 = vsel %vm312, %v321, 0.0
    %v355 = vsel %vm312, %v326, 0.0
    %v356 = vsel %vm312, %v331, 0.0
    %v357 = vsel %vm312, %v336, 0.0
    %v358 = vsel %vm312, %v341, 0.0
    %v359 = vsel %vm312, %v346, 0.0
    %v360 = vsel %vm312, %v351, 0.0
    %369 = vrot.lane.b32.xlu0 %v353, 1
    %v370 = vpop.permute.xlu0 %369
    %371 = vrot.lane.b32.xlu0 %v354, 1
    %v372 = vpop.permute.xlu0 %371
    %373 = vrot.lane.b32.xlu0 %v355, 1
    %v374 = vpop.permute.xlu0 %373
    %375 = vrot.lane.b32.xlu0 %v356, 1
    %v376 = vpop.permute.xlu0 %375
    %377 = vrot.lane.b32.xlu0 %v357, 1
    %v378 = vpop.permute.xlu0 %377
    %379 = vrot.lane.b32.xlu0 %v358, 1
    %v380 = vpop.permute.xlu0 %379
    %381 = vrot.lane.b32.xlu0 %v359, 1
    %v382 = vpop.permute.xlu0 %381
    %383 = vrot.lane.b32.xlu0 %v360, 1
    %v384 = vpop.permute.xlu0 %383
    %v393 = vadd.f32 %v302, %v370
    %v394 = vadd.f32 %v303, %v372
    %v395 = vadd.f32 %v304, %v374
    %v396 = vadd.f32 %v305, %v376
    %v397 = vadd.f32 %v306, %v378
    %v398 = vadd.f32 %v307, %v380
    %v399 = vadd.f32 %v308, %v382
    %v400 = vadd.f32 %v309, %v384
    %vm401 = vcmp.eq.s32.totalorder %v301, 15
    %v402 = vsel %vm401, 1, 0
    %vm403 = vcmp.eq.s32.totalorder %v402, 1
    %404 = vset.pattern.permute.xlu0 17
    %405 = vperm.xlu0 %404, %v302
    %v406 = vpop.permute.xlu0 %405
    %408 = vset.pattern.permute.xlu0 17
    %409 = vperm.xlu0 %408, %v303
    %v410 = vpop.permute.xlu0 %409
    %412 = vset.pattern.permute.xlu0 17
    %413 = vperm.xlu0 %412, %v304
    %v414 = vpop.permute.xlu0 %413
    %416 = vset.pattern.permute.xlu0 17
    %417 = vperm.xlu0 %416, %v305
    %v418 = vpop.permute.xlu0 %417
    %420 = vset.pattern.permute.xlu0 17
    %421 = vperm.xlu0 %420, %v306
    %v422 = vpop.permute.xlu0 %421
    %424 = vset.pattern.permute.xlu0 17
    %425 = vperm.xlu0 %424, %v307
    %v426 = vpop.permute.xlu0 %425
    %428 = vset.pattern.permute.xlu0 17
    %429 = vperm.xlu0 %428, %v308
    %v430 = vpop.permute.xlu0 %429
    %432 = vset.pattern.permute.xlu0 17
    %433 = vperm.xlu0 %432, %v309
    %v434 = vpop.permute.xlu0 %433
    %v436 = vsel %vm403, %v406, 0.0
    %v437 = vsel %vm403, %v410, 0.0
    %v438 = vsel %vm403, %v414, 0.0
    %v439 = vsel %vm403, %v418, 0.0
    %v440 = vsel %vm403, %v422, 0.0
    %v441 = vsel %vm403, %v426, 0.0
    %v442 = vsel %vm403, %v430, 0.0
    %v443 = vsel %vm403, %v434, 0.0
    %452 = vrot.lane.b32.xlu0 %v436, 1
    %v453 = vpop.permute.xlu0 %452
    %454 = vrot.lane.b32.xlu0 %v437, 1
    %v455 = vpop.permute.xlu0 %454
    %456 = vrot.lane.b32.xlu0 %v438, 1
    %v457 = vpop.permute.xlu0 %456
    %458 = vrot.lane.b32.xlu0 %v439, 1
    %v459 = vpop.permute.xlu0 %458
    %460 = vrot.lane.b32.xlu0 %v440, 1
    %v461 = vpop.permute.xlu0 %460
    %462 = vrot.lane.b32.xlu0 %v441, 1
    %v463 = vpop.permute.xlu0 %462
    %464 = vrot.lane.b32.xlu0 %v442, 1
    %v465 = vpop.permute.xlu0 %464
    %466 = vrot.lane.b32.xlu0 %v443, 1
    %v467 = vpop.permute.xlu0 %466
    %v476 = vadd.f32 %v393, %v453
    %v477 = vadd.f32 %v394, %v455
    %v478 = vadd.f32 %v395, %v457
    %v479 = vadd.f32 %v396, %v459
    %v480 = vadd.f32 %v397, %v461
    %v481 = vadd.f32 %v398, %v463
    %v482 = vadd.f32 %v399, %v465
    %v483 = vadd.f32 %v400, %v467
    %v484 = vld [vmem:[#allocation2] sm:$0x1]
    %v485 = vld [vmem:[#allocation2 + $0x10] sm:$0x1]
    %v486 = vld [vmem:[#allocation2 + $0x20] sm:$0x1]
    %v487 = vld [vmem:[#allocation2 + $0x30] sm:$0x1]
    %v488 = vld [vmem:[#allocation2 + $0x40] sm:$0x1]
    %v489 = vld [vmem:[#allocation2 + $0x50] sm:$0x1]
    %v490 = vld [vmem:[#allocation2 + $0x60] sm:$0x1]
    %v491 = vld [vmem:[#allocation2 + $0x70] sm:$0x1]
    %500 = vrot.lane.b32.xlu0 %v476, 127
    %v501 = vpop.permute.xlu0 %500
    %502 = vrot.lane.b32.xlu0 %v477, 127
    %v503 = vpop.permute.xlu0 %502
    %504 = vrot.lane.b32.xlu0 %v478, 127
    %v505 = vpop.permute.xlu0 %504
    %506 = vrot.lane.b32.xlu0 %v479, 127
    %v507 = vpop.permute.xlu0 %506
    %508 = vrot.lane.b32.xlu0 %v480, 127
    %v509 = vpop.permute.xlu0 %508
    %510 = vrot.lane.b32.xlu0 %v481, 127
    %v511 = vpop.permute.xlu0 %510
    %512 = vrot.lane.b32.xlu0 %v482, 127
    %v513 = vpop.permute.xlu0 %512
    %514 = vrot.lane.b32.xlu0 %v483, 127
    %v515 = vpop.permute.xlu0 %514
    %v524 = vadd.f32 %v484, %v501
    %v525 = vadd.f32 %v485, %v503
    %v526 = vadd.f32 %v486, %v505
    %v527 = vadd.f32 %v487, %v507
    %v528 = vadd.f32 %v488, %v509
    %v529 = vadd.f32 %v489, %v511
    %v530 = vadd.f32 %v490, %v513
    %v531 = vadd.f32 %v491, %v515
    %vm532 = vcmask 122880
    %533 = vst.msk [vmem:[#allocation2] sm:$0x1] %vm532, %v524
    %534 = vst.msk [vmem:[#allocation2 + $0x10] sm:$0x1] %vm532, %v525
    %535 = vst.msk [vmem:[#allocation2 + $0x20] sm:$0x1] %vm532, %v526
    %536 = vst.msk [vmem:[#allocation2 + $0x30] sm:$0x1] %vm532, %v527
    %537 = vst.msk [vmem:[#allocation2 + $0x40] sm:$0x1] %vm532, %v528
    %538 = vst.msk [vmem:[#allocation2 + $0x50] sm:$0x1] %vm532, %v529
    %539 = vst.msk [vmem:[#allocation2 + $0x60] sm:$0x1] %vm532, %v530
    %540 = vst.msk [vmem:[#allocation2 + $0x70] sm:$0x1] %vm532, %v531
    %v541 = vld [vmem:[%s0 + $0x11] sm:$0x1]
    %v542 = vld [vmem:[%s0 + $0x29] sm:$0x1]
    %v543 = vld [vmem:[%s0 + $0x41] sm:$0x1]
    %v544 = vld [vmem:[%s0 + $0x59] sm:$0x1]
    %v545 = vld [vmem:[%s0 + $0x71] sm:$0x1]
    %v546 = vld [vmem:[%s0 + $0x89] sm:$0x1]
    %v547 = vld [vmem:[%s0 + $0xa1] sm:$0x1]
    %v548 = vld [vmem:[%s0 + $0xb9] sm:$0x1]
    %550 = vset.pattern.permute.xlu0 0
    %551 = vperm.xlu0 %550, %v541
    %v552 = vpop.permute.xlu0 %551
    %555 = vset.pattern.permute.xlu0 0
    %556 = vperm.xlu0 %555, %v542
    %v557 = vpop.permute.xlu0 %556
    %560 = vset.pattern.permute.xlu0 0
    %561 = vperm.xlu0 %560, %v543
    %v562 = vpop.permute.xlu0 %561
    %565 = vset.pattern.permute.xlu0 0
    %566 = vperm.xlu0 %565, %v544
    %v567 = vpop.permute.xlu0 %566
    %570 = vset.pattern.permute.xlu0 0
    %571 = vperm.xlu0 %570, %v545
    %v572 = vpop.permute.xlu0 %571
    %575 = vset.pattern.permute.xlu0 0
    %576 = vperm.xlu0 %575, %v546
    %v577 = vpop.permute.xlu0 %576
    %580 = vset.pattern.permute.xlu0 0
    %581 = vperm.xlu0 %580, %v547
    %v582 = vpop.permute.xlu0 %581
    %585 = vset.pattern.permute.xlu0 0
    %586 = vperm.xlu0 %585, %v548
    %v587 = vpop.permute.xlu0 %586
    %v589 = vsel %vm312, %v552, 0.0
    %v590 = vsel %vm312, %v557, 0.0
    %v591 = vsel %vm312, %v562, 0.0
    %v592 = vsel %vm312, %v567, 0.0
    %v593 = vsel %vm312, %v572, 0.0
    %v594 = vsel %vm312, %v577, 0.0
    %v595 = vsel %vm312, %v582, 0.0
    %v596 = vsel %vm312, %v587, 0.0
    %605 = vrot.lane.b32.xlu0 %v589, 1
    %v606 = vpop.permute.xlu0 %605
    %607 = vrot.lane.b32.xlu0 %v590, 1
    %v608 = vpop.permute.xlu0 %607
    %609 = vrot.lane.b32.xlu0 %v591, 1
    %v610 = vpop.permute.xlu0 %609
    %611 = vrot.lane.b32.xlu0 %v592, 1
    %v612 = vpop.permute.xlu0 %611
    %613 = vrot.lane.b32.xlu0 %v593, 1
    %v614 = vpop.permute.xlu0 %613
    %615 = vrot.lane.b32.xlu0 %v594, 1
    %v616 = vpop.permute.xlu0 %615
    %617 = vrot.lane.b32.xlu0 %v595, 1
    %v618 = vpop.permute.xlu0 %617
    %619 = vrot.lane.b32.xlu0 %v596, 1
    %v620 = vpop.permute.xlu0 %619
    %v629 = vadd.f32 %v541, %v606
    %v630 = vadd.f32 %v542, %v608
    %v631 = vadd.f32 %v543, %v610
    %v632 = vadd.f32 %v544, %v612
    %v633 = vadd.f32 %v545, %v614
    %v634 = vadd.f32 %v546, %v616
    %v635 = vadd.f32 %v547, %v618
    %v636 = vadd.f32 %v548, %v620
    %637 = vset.pattern.permute.xlu0 17
    %638 = vperm.xlu0 %637, %v541
    %v639 = vpop.permute.xlu0 %638
    %641 = vset.pattern.permute.xlu0 17
    %642 = vperm.xlu0 %641, %v542
    %v643 = vpop.permute.xlu0 %642
    %645 = vset.pattern.permute.xlu0 17
    %646 = vperm.xlu0 %645, %v543
    %v647 = vpop.permute.xlu0 %646
    %649 = vset.pattern.permute.xlu0 17
    %650 = vperm.xlu0 %649, %v544
    %v651 = vpop.permute.xlu0 %650
    %653 = vset.pattern.permute.xlu0 17
    %654 = vperm.xlu0 %653, %v545
    %v655 = vpop.permute.xlu0 %654
    %657 = vset.pattern.permute.xlu0 17
    %658 = vperm.xlu0 %657, %v546
    %v659 = vpop.permute.xlu0 %658
    %661 = vset.pattern.permute.xlu0 17
    %662 = vperm.xlu0 %661, %v547
    %v663 = vpop.permute.xlu0 %662
    %665 = vset.pattern.permute.xlu0 17
    %666 = vperm.xlu0 %665, %v548
    %v667 = vpop.permute.xlu0 %666
    %v669 = vsel %vm403, %v639, 0.0
    %v670 = vsel %vm403, %v643, 0.0
    %v671 = vsel %vm403, %v647, 0.0
    %v672 = vsel %vm403, %v651, 0.0
    %v673 = vsel %vm403, %v655, 0.0
    %v674 = vsel %vm403, %v659, 0.0
    %v675 = vsel %vm403, %v663, 0.0
    %v676 = vsel %vm403, %v667, 0.0
    %685 = vrot.lane.b32.xlu0 %v669, 1
    %v686 = vpop.permute.xlu0 %685
    %687 = vrot.lane.b32.xlu0 %v670, 1
    %v688 = vpop.permute.xlu0 %687
    %689 = vrot.lane.b32.xlu0 %v671, 1
    %v690 = vpop.permute.xlu0 %689
    %691 = vrot.lane.b32.xlu0 %v672, 1
    %v692 = vpop.permute.xlu0 %691
    %693 = vrot.lane.b32.xlu0 %v673, 1
    %v694 = vpop.permute.xlu0 %693
    %695 = vrot.lane.b32.xlu0 %v674, 1
    %v696 = vpop.permute.xlu0 %695
    %697 = vrot.lane.b32.xlu0 %v675, 1
    %v698 = vpop.permute.xlu0 %697
    %699 = vrot.lane.b32.xlu0 %v676, 1
    %v700 = vpop.permute.xlu0 %699
    %v709 = vadd.f32 %v629, %v686
    %v710 = vadd.f32 %v630, %v688
    %v711 = vadd.f32 %v631, %v690
    %v712 = vadd.f32 %v632, %v692
    %v713 = vadd.f32 %v633, %v694
    %v714 = vadd.f32 %v634, %v696
    %v715 = vadd.f32 %v635, %v698
    %v716 = vadd.f32 %v636, %v700
    %v717 = vld [vmem:[#allocation2 + $0xf] sm:$0x1]
    %v718 = vld [vmem:[#allocation2 + $0x1f] sm:$0x1]
    %v719 = vld [vmem:[#allocation2 + $0x2f] sm:$0x1]
    %v720 = vld [vmem:[#allocation2 + $0x3f] sm:$0x1]
    %v721 = vld [vmem:[#allocation2 + $0x4f] sm:$0x1]
    %v722 = vld [vmem:[#allocation2 + $0x5f] sm:$0x1]
    %v723 = vld [vmem:[#allocation2 + $0x6f] sm:$0x1]
    %v724 = vld [vmem:[#allocation2 + $0x7f] sm:$0x1]
    %733 = vrot.lane.b32.xlu0 %v709, 127
    %v734 = vpop.permute.xlu0 %733
    %735 = vrot.lane.b32.xlu0 %v710, 127
    %v736 = vpop.permute.xlu0 %735
    %737 = vrot.lane.b32.xlu0 %v711, 127
    %v738 = vpop.permute.xlu0 %737
    %739 = vrot.lane.b32.xlu0 %v712, 127
    %v740 = vpop.permute.xlu0 %739
    %741 = vrot.lane.b32.xlu0 %v713, 127
    %v742 = vpop.permute.xlu0 %741
    %743 = vrot.lane.b32.xlu0 %v714, 127
    %v744 = vpop.permute.xlu0 %743
    %745 = vrot.lane.b32.xlu0 %v715, 127
    %v746 = vpop.permute.xlu0 %745
    %747 = vrot.lane.b32.xlu0 %v716, 127
    %v748 = vpop.permute.xlu0 %747
    %v757 = vadd.f32 %v717, %v734
    %v758 = vadd.f32 %v718, %v736
    %v759 = vadd.f32 %v719, %v738
    %v760 = vadd.f32 %v720, %v740
    %v761 = vadd.f32 %v721, %v742
    %v762 = vadd.f32 %v722, %v744
    %v763 = vadd.f32 %v723, %v746
    %v764 = vadd.f32 %v724, %v748
    %765 = vst.msk [vmem:[#allocation2 + $0xf] sm:$0x1] %vm532, %v757
    %766 = vst.msk [vmem:[#allocation2 + $0x1f] sm:$0x1] %vm532, %v758
    %767 = vst.msk [vmem:[#allocation2 + $0x2f] sm:$0x1] %vm532, %v759
    %768 = vst.msk [vmem:[#allocation2 + $0x3f] sm:$0x1] %vm532, %v760
    %769 = vst.msk [vmem:[#allocation2 + $0x4f] sm:$0x1] %vm532, %v761
    %770 = vst.msk [vmem:[#allocation2 + $0x5f] sm:$0x1] %vm532, %v762
    %771 = vst.msk [vmem:[#allocation2 + $0x6f] sm:$0x1] %vm532, %v763
    %772 = vst.msk [vmem:[#allocation2 + $0x7f] sm:$0x1] %vm532, %v764
    // Predicated region
    $region6: #{tpu_custom_call.1} parent=1 // pred_check
      _
    $region7: #{tpu_custom_call.1} parent=1 // pred_check_branch
      %774 = sbr.rel (0) target = $region9
    $region8: #{tpu_custom_call.1} parent=1 // pred_region
      %s776 = ssub.s32 2048, 2048
      %777 = vsyncadd [#allocation3], %s776
      %s778 = sshll.u32 [#allocation2], 4
      %s779 = int_to_ptr.vmem [resolvable:$true] %s778
      %784 = dma.vmem_to_hbm [thread:$0]  %s779, 2048, %s1, [#allocation3], 128, 128, 8
    $region9: #{tpu_custom_call.1} parent=1 // pred_fallthru
      _
    // Predicated region
    $region10: #{tpu_custom_call.1} parent=1 // pred_check
      _
    $region11: #{tpu_custom_call.1} parent=1 // pred_check_branch
      %786 = sbr.rel (0) target = $region13
    $region12: #{tpu_custom_call.1} parent=1 // pred_region
      %787 = dma.done [#allocation3], 2048
    $region13: #{tpu_custom_call.1} parent=1 // pred_fallthru
      _
    %788 = vsyncpa [#allocation3], 1

</llo_original>
